<compile_context>
chip_gen: v6e
topology: v6e:2x2x1
jax: 0.10.0
libtpu: 0.0.40
codegen_flags: <defaults>
</compile_context>

<pallas_src>
import jax
import jax.numpy as jnp
from jax.experimental import pallas as pl
from jax.experimental.pallas import tpu as pltpu


def _round_up(x, m):
    return (x + m - 1) // m * m


def _relu_linear_kernel(w_ref, b_ref, x_ref, o_ref):
    """w_ref: SMEM (4,) row-major flat of W (out_features, in_features).
    b_ref: SMEM (2,).
    x_ref / o_ref: VMEM (2, TILE_N) lane-dense tiles (batch on the lane axis).
    """
    x = jnp.maximum(x_ref[...], 0.0)          # ReLU: full-lane-width VPU op
    r0 = x[0:1, :]                            # feature 0 across all batch lanes
    r1 = x[1:2, :]                            # feature 1 across all batch lanes
    # y^T[j, :] = W[j,0]*r0 + W[j,1]*r1 + b[j]  -- pure VPU, no MXU push/pop.
    o_ref[0:1, :] = w_ref[0] * r0 + w_ref[1] * r1 + b_ref[0]
    o_ref[1:2, :] = w_ref[2] * r0 + w_ref[3] * r1 + b_ref[1]


def relu_linear(x, w, b, *, tile_n=512):
    """x: (N, 2) f32, w: (2, 2) f32 (PyTorch layout [out_features, in_features]),
    b: (2,) f32.  Returns (N, 2) f32 = relu(x) @ w.T + b.

    Note: for a literal tiny batch (e.g. N=8) a plain fused XLA expression would
    beat any custom kernel; this Pallas path is laid out for large-N streaming
    (lane-dense tiles over the batch, double-buffered by BlockSpec pipelining,
    batch axis marked "parallel" so v7x's two TensorCores both work).
    """
    n, f_in = x.shape
    f_out, f_in_w = w.shape
    assert f_in == 2 and f_out == 2 and f_in_w == 2, "kernel specialized to Linear(2, 2)"

    # Batch lives on the lane axis: tile must be a multiple of 128.
    tile_n = _round_up(min(tile_n, _round_up(n, 128)), 128)
    n_pad = _round_up(n, tile_n)

    xt = jnp.pad(x.T, ((0, 0), (0, n_pad - n)))   # (2, n_pad), lane-dense
    w_flat = w.reshape(-1)                        # (4,) row-major: [w00, w01, w10, w11]

    yt = pl.pallas_call(
        _relu_linear_kernel,
        out_shape=jax.ShapeDtypeStruct((f_out, n_pad), x.dtype),
        grid=(n_pad // tile_n,),
        in_specs=[
            pl.BlockSpec(memory_space=pltpu.MemorySpace.SMEM),   # w_flat: 4 scalars
            pl.BlockSpec(memory_space=pltpu.MemorySpace.SMEM),   # b: 2 scalars
            pl.BlockSpec((f_in, tile_n), lambda i: (0, i)),      # x^T batch tile
        ],
        out_specs=pl.BlockSpec((f_out, tile_n), lambda i: (0, i)),
        compiler_params=pltpu.CompilerParams(
            # Batch tiles are independent: shard across TensorCores on v7x;
            # harmless on single-TC v5e/v6e.
            dimension_semantics=("parallel",),
        ),
    )(w_flat, b, xt)

    return yt[:, :n].T                            # back to (N, 2)


def _reference(x, w, b):
    return jnp.maximum(x, 0.0) @ w.T + b


if __name__ == "__main__":
    key = jax.random.PRNGKey(0)
    kx, kw, kb, kx2 = jax.random.split(key, 4)

    # Deterministic "parameter init" mimicking nn.Linear(2, 2):
    # weight shape (out_features=2, in_features=2), bias shape (2,)
    bound = 1.0 / jnp.sqrt(2.0)
    w = jax.random.uniform(kw, (2, 2), jnp.float32, -bound, bound)
    b = jax.random.uniform(kb, (2,), jnp.float32, -bound, bound)

    # Example input: batch=8 rows of 2 features (matches net.forward).
    x = jax.random.normal(kx, (8, 2), jnp.float32)
    out = jax.block_until_ready(relu_linear(x, w, b))
    ref = _reference(x, w, b)
    assert out.shape == (8, 2)
    assert jnp.allclose(out, ref, atol=1e-5, rtol=1e-5), "mismatch vs reference (N=8)"

    # Larger, non-multiple-of-tile batch exercises padding + multi-tile grid.
    x2 = jax.random.normal(kx2, (1000, 2), jnp.float32)
    out2 = jax.block_until_ready(relu_linear(x2, w, b))
    ref2 = _reference(x2, w, b)
    assert out2.shape == (1000, 2)
    assert jnp.allclose(out2, ref2, atol=1e-5, rtol=1e-5), "mismatch vs reference (N=1000)"

    print("KERNEL_OK")
</pallas_src>

<mosaic_0001>
module attributes {stable_mosaic.version = 11 : i64} {
  func.func @_relu_linear_kernel(%arg0: i32, %arg1: memref<4xf32, #tpu.memory_space<smem>>, %arg2: memref<2xf32, #tpu.memory_space<smem>>, %arg3: memref<2x128xf32, #tpu.memory_space<vmem>>, %arg4: memref<2x128xf32, #tpu.memory_space<vmem>>) attributes {dimension_semantics = [#tpu.dimension_semantics<parallel>], iteration_bounds = array<i64: 1>, scalar_prefetch = 0 : i64, scratch_operands = 0 : i64, tpu.core_type = #tpu.core_type<tc>, window_params = [{transform_indices = @transform_0, window_bounds = array<i64: 4>}, {transform_indices = @transform_1, window_bounds = array<i64: 2>}, {transform_indices = @transform_2, window_bounds = array<i64: 2, 128>}, {transform_indices = @transform_3, window_bounds = array<i64: 2, 128>}]} {
    %c0 = arith.constant 0 : index
    %c0_0 = arith.constant 0 : index
    %0 = vector.load %arg3[%c0, %c0_0] : memref<2x128xf32, #tpu.memory_space<vmem>>, vector<2x128xf32>
    %cst = arith.constant 0.000000e+00 : f32
    %1 = vector.broadcast %cst : f32 to vector<2x128xf32>
    %2 = arith.maximumf %0, %1 : vector<2x128xf32>
    %3 = vector.extract_strided_slice %2 {offsets = [0, 0], sizes = [1, 128], strides = [1, 1]} : vector<2x128xf32> to vector<1x128xf32>
    %4 = vector.extract_strided_slice %2 {offsets = [1, 0], sizes = [1, 128], strides = [1, 1]} : vector<2x128xf32> to vector<1x128xf32>
    %c0_1 = arith.constant 0 : index
    %5 = memref.load %arg1[%c0_1] : memref<4xf32, #tpu.memory_space<smem>>
    %6 = vector.broadcast %5 : f32 to vector<1x128xf32>
    %7 = arith.mulf %6, %3 : vector<1x128xf32>
    %c1 = arith.constant 1 : index
    %8 = memref.load %arg1[%c1] : memref<4xf32, #tpu.memory_space<smem>>
    %9 = vector.broadcast %8 : f32 to vector<1x128xf32>
    %10 = arith.mulf %9, %4 : vector<1x128xf32>
    %11 = arith.addf %7, %10 : vector<1x128xf32>
    %c0_2 = arith.constant 0 : index
    %12 = memref.load %arg2[%c0_2] : memref<2xf32, #tpu.memory_space<smem>>
    %13 = vector.broadcast %12 : f32 to vector<1x128xf32>
    %14 = arith.addf %11, %13 : vector<1x128xf32>
    %c0_3 = arith.constant 0 : index
    %c0_4 = arith.constant 0 : index
    %15 = vector.load %arg4[%c0_3, %c0_4] : memref<2x128xf32, #tpu.memory_space<vmem>>, vector<1x128xf32>
    tpu.vector_store %arg4[%c0_3, %c0_4], %14 {strides = array<i32>} : memref<2x128xf32, #tpu.memory_space<vmem>>, vector<1x128xf32>,
    %c2 = arith.constant 2 : index
    %16 = memref.load %arg1[%c2] : memref<4xf32, #tpu.memory_space<smem>>
    %17 = vector.broadcast %16 : f32 to vector<1x128xf32>
    %18 = arith.mulf %17, %3 : vector<1x128xf32>
    %c3 = arith.constant 3 : index
    %19 = memref.load %arg1[%c3] : memref<4xf32, #tpu.memory_space<smem>>
    %20 = vector.broadcast %19 : f32 to vector<1x128xf32>
    %21 = arith.mulf %20, %4 : vector<1x128xf32>
    %22 = arith.addf %18, %21 : vector<1x128xf32>
    %c1_5 = arith.constant 1 : index
    %23 = memref.load %arg2[%c1_5] : memref<2xf32, #tpu.memory_space<smem>>
    %24 = vector.broadcast %23 : f32 to vector<1x128xf32>
    %25 = arith.addf %22, %24 : vector<1x128xf32>
    %c1_6 = arith.constant 1 : index
    %c0_7 = arith.constant 0 : index
    %26 = vector.load %arg4[%c1_6, %c0_7] : memref<2x128xf32, #tpu.memory_space<vmem>>, vector<1x128xf32>
    tpu.vector_store %arg4[%c1_6, %c0_7], %25 {strides = array<i32>} : memref<2x128xf32, #tpu.memory_space<vmem>>, vector<1x128xf32>,
    return
  }
  func.func @transform_0(%arg0: i32) -> i32 {
    %c0_i32 = arith.constant 0 : i32
    %c0_i32_0 = arith.constant 0 : i32
    return %c0_i32 : i32
  }
  func.func @transform_1(%arg0: i32) -> i32 {
    %c0_i32 = arith.constant 0 : i32
    %c0_i32_0 = arith.constant 0 : i32
    return %c0_i32 : i32
  }
  func.func @transform_2(%arg0: i32) -> (i32, i32) {
    %c0_i32 = arith.constant 0 : i32
    %c0_i32_0 = arith.constant 0 : i32
    return %c0_i32, %arg0 : i32, i32
  }
  func.func @transform_3(%arg0: i32) -> (i32, i32) {
    %c0_i32 = arith.constant 0 : i32
    %c0_i32_0 = arith.constant 0 : i32
    return %c0_i32, %arg0 : i32, i32
  }
}

</mosaic_0001>

<llo_original>
// kernel: tpu_custom_call.1
$region0: #{tpu_custom_call.1}
  #allocation0 [shape = 'u32[]', space=smem, size = 0x4, offset = 0x4, fixed_abs, tag = 'smem constant byte address 0x4 - core index']
  #allocation1 [shape = 'u32[144,128]{1,0:T(1,128)}', space=vmem, size = 0x12000, scoped, tag = 'internal scratch']
  %s0 = inlined_call_operand.hbm [shape: f32[4], index: 0, kind: input, shape index: {}]
  %s1 = inlined_call_operand.vmem [shape: f32[2], index: 1, kind: input, shape index: {}]
  %s2 = inlined_call_operand.vmem [shape: f32[2,128], index: 2, kind: input, shape index: {}]
  %s3 = inlined_call_operand.hbm [shape: f32[2,128], index: 3, kind: output, shape index: {}]
  %s4 = sld [smem:[#allocation0]]
  $region30: #{tpu_custom_call.1} parent=0
    _
  %s6 = ssub.s32 1, %s4
  %s7 = scalar_select 0, %s6, %s4
  $region1: #{tpu_custom_call.1} parent=0
    #allocation2 [shape = 'u8[512]{0}', space=smem, size = 0x200, scoped, tag = 'input window, operand 0, single buffered']
    #allocation3 [shape = 's32[1]{0}', space=sflag, size = 0x4, scoped, tag = 'scoped memory for tpu_custom_call.1']
    #allocation4 [shape = 's32[1]{0}', space=sflag, size = 0x4, scoped, tag = 'scoped memory for tpu_custom_call.1']
    #allocation5 [shape = 's32[1]{0}', space=sflag, size = 0x4, scoped, tag = 'scoped memory for tpu_custom_call.1']
    #allocation6 [shape = 'u8[512]{0}', space=smem, size = 0x200, scoped, tag = 'input window, operand 1, single buffered']
    #allocation7 [shape = 'u8[1024]{0}', space=vmem, size = 0x400, scoped, tag = 'output window, operand 0, single buffered']
    %8 = vsyncpa [#allocation4], 0
    %9 = vsyncpa [#allocation5], 0
    %10 = vsyncpa [#allocation3], 0
    // Predicated region
    $region2: #{tpu_custom_call.1} parent=1 // pred_check
      _
    $region3: #{tpu_custom_call.1} parent=1 // pred_check_branch
      %12 = sbr.rel (0) target = $region5
    $region4: #{tpu_custom_call.1} parent=1 // pred_region
      %s14 = ssub.s32 16, 16
      %15 = vsyncadd [#allocation4], %s14
      %18 = dma.hbm_to_smem %s0, 16, [#allocation2], [#allocation4]
    $region5: #{tpu_custom_call.1} parent=1 // pred_fallthru
      _
    // Predicated region
    $region6: #{tpu_custom_call.1} parent=1 // pred_check
      _
    $region7: #{tpu_custom_call.1} parent=1 // pred_check_branch
      %20 = sbr.rel (0) target = $region9
    $region8: #{tpu_custom_call.1} parent=1 // pred_region
      %s22 = ssub.s32 16, 16
      %23 = vsyncadd [#allocation5], %s22
      %s25 = sshll.u32 %s1, 4
      %s26 = int_to_ptr.vmem [resolvable:$true] %s25
      %28 = dma.vmem_to_smem %s26, 16, [#allocation6], [#allocation5]
    $region9: #{tpu_custom_call.1} parent=1 // pred_fallthru
      _
    // Predicated region
    $region10: #{tpu_custom_call.1} parent=1 // pred_check
      _
    $region11: #{tpu_custom_call.1} parent=1 // pred_check_branch
      %30 = sbr.rel (0) target = $region13
    $region12: #{tpu_custom_call.1} parent=1 // pred_region
      _
    $region13: #{tpu_custom_call.1} parent=1 // pred_fallthru
      _
    // Predicated region
    $region14: #{tpu_custom_call.1} parent=1 // pred_check
      _
    $region15: #{tpu_custom_call.1} parent=1 // pred_check_branch
      %32 = sbr.rel (0) target = $region17
    $region16: #{tpu_custom_call.1} parent=1 // pred_region
      %33 = dma.done [#allocation4], 16
    $region17: #{tpu_custom_call.1} parent=1 // pred_fallthru
      _
    // Predicated region
    $region18: #{tpu_custom_call.1} parent=1 // pred_check
      _
    $region19: #{tpu_custom_call.1} parent=1 // pred_check_branch
      %35 = sbr.rel (0) target = $region21
    $region20: #{tpu_custom_call.1} parent=1 // pred_region
      %36 = dma.done [#allocation5], 16
    $region21: #{tpu_custom_call.1} parent=1 // pred_fallthru
      _
    %37 = sfence
    %v38 = vld [vmem:[%s2] sm:$0x3]
    %v39 = vmax.f32 %v38, 0.0
    %s40 = sld [smem:[#allocation2]]
    %v41 = vstv %s40
    %v42 = vmul.f32 %v41, %v39
    %s43 = sld [smem:[#allocation2 + $0x1]]
    %v44 = vstv %s43
    %v45 = vmul.f32 %v44, %v39
    %v47 = vrot.slane %v45, 1
    %v49 = vadd.f32 %v42, %v47
    %s50 = sld [smem:[#allocation6]]
    %v51 = vstv %s50
    %v52 = vadd.f32 %v49, %v51
    %53 = vst [vmem:[#allocation7] sm:$0x1] %v52
    %s54 = sld [smem:[#allocation2 + $0x2]]
    %v55 = vstv %s54
    %v56 = vmul.f32 %v55, %v39
    %s57 = sld [smem:[#allocation2 + $0x3]]
    %v58 = vstv %s57
    %v59 = vmul.f32 %v58, %v39
    %v61 = vrot.slane %v59, 1
    %v63 = vadd.f32 %v56, %v61
    %s64 = sld [smem:[#allocation6 + $0x1]]
    %v65 = vstv %s64
    %v66 = vadd.f32 %v63, %v65
    %67 = vst [vmem:[#allocation7 + $0x1] sm:$0x1] %v66
    // Predicated region
    $region22: #{tpu_custom_call.1} parent=1 // pred_check
      _
    $region23: #{tpu_custom_call.1} parent=1 // pred_check_branch
      %69 = sbr.rel (0) target = $region25
    $region24: #{tpu_custom_call.1} parent=1 // pred_region
      %s71 = ssub.s32 32, 32
      %72 = vsyncadd [#allocation3], %s71
      %s74 = sshll.u32 [#allocation7], 4
      %s75 = int_to_ptr.vmem [resolvable:$true] %s74
      %77 = dma.vmem_to_hbm [thread:$0]  %s75, 32, %s3, [#allocation3]
    $region25: #{tpu_custom_call.1} parent=1 // pred_fallthru
      _
    // Predicated region
    $region26: #{tpu_custom_call.1} parent=1 // pred_check
      _
    $region27: #{tpu_custom_call.1} parent=1 // pred_check_branch
      %79 = sbr.rel (0) target = $region29
    $region28: #{tpu_custom_call.1} parent=1 // pred_region
      %80 = dma.done [#allocation3], 32
    $region29: #{tpu_custom_call.1} parent=1 // pred_fallthru
      _
    %81 = vsyncpa [#allocation3], 1
    %82 = vsyncpa [#allocation4], 1
    %83 = vsyncpa [#allocation5], 1

</llo_original>
